<compile_context>
chip_gen: v5e
topology: v5e:2x2
jax: 0.10.0
libtpu: 0.0.40
codegen_flags: <defaults>
</compile_context>

<pallas_src>
import functools

import numpy as np
import jax
import jax.numpy as jnp
from jax.experimental import pallas as pl
from jax.experimental.pallas import tpu as pltpu


def _grad_edge_kernel(x_ref, a_ref, blr_ref, bf_ref, o_ref, *,
                      bias, th, rslab, margin, h):
    # x_ref   : (H, W)           image (input float dtype)
    # a_ref   : (2*TH, RSLAB)    per-row-tile [A_top; A_bot] band, bf16
    # blr_ref : (W, 2*W)         [B_left | B_right], bf16
    # bf_ref  : (W, W)           B_full, bf16
    # o_ref   : (TH, W)          output row tile, f32
    t = pl.program_id(1)

    # Source-row slab feeding this output tile (covers the reflected +/-k band).
    if rslab == h:
        x_slab = x_ref[...].astype(jnp.bfloat16)
    else:
        r0 = pl.multiple_of(jnp.clip(t * th - margin, 0, h - rslab), 8)
        x_slab = x_ref[pl.ds(r0, rslab), :].astype(jnp.bfloat16)

    # Rows owned by this tile (the window centre maps back to row i).
    if th == h:
        x_rows = x_ref[...].astype(jnp.float32)
    else:
        row0 = pl.multiple_of(t * th, 8)
        x_rows = x_ref[pl.ds(row0, th), :].astype(jnp.float32)

    # Stage 1: both half row-window sums in one bf16 MXU dot, f32 accumulate.
    t12 = jnp.dot(a_ref[...], x_slab, preferred_element_type=jnp.float32)  # (2TH, W)
    t1 = t12[:th]
    t2 = t12[th:]
    u = t1 + t2 - x_rows                                                   # (TH, W)

    # Stage 2: fused column window sums.  Bias (= 0.01 * window tap count)
    # folded in as a scalar.  Keep these in f32 if bit-exact parity is needed.
    gxlr = jnp.dot(u.astype(jnp.bfloat16), blr_ref[...],
                   preferred_element_type=jnp.float32) + bias              # (TH, 2W)
    gy12 = jnp.dot(t12.astype(jnp.bfloat16), bf_ref[...],
                   preferred_element_type=jnp.float32) + bias              # (2TH, W)

    w = blr_ref.shape[1] // 2
    gx1, gx2 = gxlr[:, :w], gxlr[:, w:]
    gy1, gy2 = gy12[:th], gy12[th:]

    gx = jnp.log(gx1 * pl.reciprocal(gx2, approx=True))
    gy = jnp.log(gy1 * pl.reciprocal(gy2, approx=True))

    nrm = jnp.sqrt(gx * gx + gy * gy)
    # nrm >= 0 (or NaN): nan -> 0, int32-safe clamp, truncate, wrap to uint8.
    v = jnp.where(jnp.isnan(nrm), 0.0, jnp.minimum(nrm, 2147483392.0))
    o_ref[...] = jnp.bitwise_and(v.astype(jnp.int32), 255).astype(jnp.float32)


def _reflect_onehot(n, k):
    # One-hot map from a reflect-padded index (length n+2k) to its source index,
    # matching F.pad(..., mode='reflect').
    p = np.arange(n + 2 * k)
    o = np.abs(p - k)
    o = np.where(o > n - 1, 2 * (n - 1) - o, o)
    m = np.zeros((n + 2 * k, n), np.float32)
    m[np.arange(n + 2 * k), o] = 1.0
    return m


def _band(n, k, lo, hi):
    # M[i, p] = 1 iff i + lo <= p <= i + hi  (padded-index space).
    i = np.arange(n)[:, None]
    p = np.arange(n + 2 * k)[None, :]
    return ((p >= i + lo) & (p <= i + hi)).astype(np.float32)


def _row_tile_cap():
    try:
        kind = jax.devices()[0].device_kind.lower()
    except Exception:
        kind = ""
    # v5e's MXU is 128-wide; 256 matches the MXU M dimension on v6e/v7x.
    if "v5 lite" in kind or "v5lite" in kind or "v5e" in kind:
        return 128
    return 256


def _pick_row_tile(h):
    if h % 8 != 0 or h < 16:
        return h
    cap = min(_row_tile_cap(), h // 2)
    th = 8
    for t in range(8, cap + 1, 8):
        if h % t == 0:
            th = t
    return th


def _vmem_cap_bytes():
    phys = None
    try:
        phys = int(pltpu.get_tpu_info().vmem_capacity_bytes)
    except Exception:
        phys = None
    if not phys:
        try:
            kind = jax.devices()[0].device_kind.lower()
        except Exception:
            kind = ""
        phys = (64 if "v7" in kind else 128) * 2 ** 20
    return (phys * 3) // 4          # ~48 MiB on v7x, ~96 MiB on v5e/v6e


def grad_edge(x, kensize=5):
    """x: (N, C, H, W); C must be 1 (module conv weights are (1, 1, K, K))."""
    k = int(kensize)
    N, C, H, W = x.shape
    if k > H - 1 or k > W - 1:
        raise ValueError("reflect padding requires kensize <= min(H, W) - 1")
    B = N * C
    xb = x.reshape(B, H, W)
    if not jnp.issubdtype(xb.dtype, jnp.floating) or xb.dtype == jnp.float64:
        # TODO(synk): keep uint8 images end-to-end (halves image DMA); upcast for now.
        xb = xb.astype(jnp.float32)

    TH = _pick_row_tile(H)
    n_t = H // TH
    margin = ((k + 7) // 8) * 8              # aligned half-width of the row band
    RSLAB = TH + 2 * margin
    if RSLAB >= H:
        RSLAB, margin = H, 0                 # small images: dense row transform

    # Banded row / column transforms with reflect padding folded in.  Entries are
    # small non-negative integer counts -> exact in bf16.
    r_rows = _reflect_onehot(H, k)
    r_cols = _reflect_onehot(W, k)
    a_top = _band(H, k, 0, k) @ r_rows               # (H, H)
    a_bot = _band(H, k, k, 2 * k) @ r_rows           # (H, H)
    b_full = (_band(W, k, 0, 2 * k) @ r_cols).T      # (W, W)
    b_lr = np.concatenate([(_band(W, k, 0, k) @ r_cols).T,
                           (_band(W, k, k, 2 * k) @ r_cols).T], axis=1)  # (W, 2W)

    # Per-row-tile [A_top; A_bot] restricted to the source-row slab it needs.
    a_tiles = []
    for t in range(n_t):
        r0 = min(max(t * TH - margin, 0), H - RSLAB)
        a_tiles.append(np.concatenate(
            [a_top[t * TH:(t + 1) * TH, r0:r0 + RSLAB],
             a_bot[t * TH:(t + 1) * TH, r0:r0 + RSLAB]], axis=0))
    a_cat = jnp.asarray(np.stack(a_tiles, 0), dtype=jnp.bfloat16)  # (n_t, 2TH, RSLAB)
    b_lr = jnp.asarray(b_lr, dtype=jnp.bfloat16)
    b_full = jnp.asarray(b_full, dtype=jnp.bfloat16)

    # +0.01 was added to every padded pixel; each half window has (2k+1)(k+1) taps.
    bias = 0.01 * (2 * k + 1) * (k + 1)

    # VMEM: double-buffered blocks + ~18 live (TH, W) f32 intermediates.
    block_bytes = (2 * H * W * xb.dtype.itemsize
                   + 2 * (2 * TH) * RSLAB * 2
                   + 2 * (2 * W * W + W * W) * 2
                   + 2 * TH * W * 4)
    vmem_limit = int(min(_vmem_cap_bytes(),
                         max(32 * 2 ** 20, 2 * (block_bytes + 18 * TH * W * 4))))

    kernel = functools.partial(_grad_edge_kernel, bias=float(bias), th=TH,
                               rslab=RSLAB, margin=margin, h=H)

    # Megacore: shard the batch when B >= 2 so each core keeps private image /
    # constant streams; only split the row-tile axis when there is no batch.
    sems = ("parallel", "parallel") if B == 1 else ("parallel", "arbitrary")

    out = pl.pallas_call(
        kernel,
        out_shape=jax.ShapeDtypeStruct((B, H, W), jnp.float32),
        grid=(B, n_t),
        in_specs=[
            pl.BlockSpec((None, H, W), lambda b, t: (b, 0, 0)),          # image (DMA once per b)
            pl.BlockSpec((None, 2 * TH, RSLAB), lambda b, t: (t, 0, 0)),  # per-tile row bands
            pl.BlockSpec((W, 2 * W), lambda b, t: (0, 0)),               # [B_left | B_right]
            pl.BlockSpec((W, W), lambda b, t: (0, 0)),                   # B_full
        ],
        out_specs=pl.BlockSpec((None, TH, W), lambda b, t: (b, t, 0)),
        compiler_params=pltpu.CompilerParams(
            dimension_semantics=sems,
            vmem_limit_bytes=vmem_limit,
        ),
    )(xb, a_cat, b_lr, b_full)
    return out.reshape(N, C, H, W)


def _grad_edge_ref(x, kensize=5):
    # Pure-JAX mirror of the PyTorch module (sanity check only).
    k = kensize
    N, C, H, W = x.shape
    xb = x.reshape(N * C, H, W).astype(jnp.float32)
    xp = jnp.pad(xb, ((0, 0), (k, k), (k, k)), mode="reflect") + 0.01
    s = sum(xp[:, d:d + H, :] for d in range(2 * k + 1))
    t = sum(xp[:, :, d:d + W] for d in range(2 * k + 1))
    gx1 = sum(s[:, :, d:d + W] for d in range(k + 1))
    gx2 = sum(s[:, :, d:d + W] for d in range(k, 2 * k + 1))
    gy1 = sum(t[:, d:d + H, :] for d in range(k + 1))
    gy2 = sum(t[:, d:d + H, :] for d in range(k, 2 * k + 1))
    gx = jnp.log(gx1 / gx2)
    gy = jnp.log(gy1 / gy2)
    v = jnp.nan_to_num(jnp.sqrt(gx * gx + gy * gy))
    u8 = jnp.bitwise_and(jnp.clip(v, 0.0, 2147483392.0).astype(jnp.int32), 255)
    return u8.astype(jnp.float32).reshape(N, C, H, W)


if __name__ == "__main__":
    key = jax.random.PRNGKey(0)
    k1, k2 = jax.random.split(key)

    # Module's conv weights are (1, 1, K, K) -> single-channel NCHW input.
    x1 = jax.random.uniform(k1, (2, 1, 16, 16), dtype=jnp.float32)
    y1 = grad_edge(x1, kensize=5)
    jax.block_until_ready(y1)
    assert y1.shape == (2, 1, 16, 16)
    d1 = float(jnp.max(jnp.abs(y1 - _grad_edge_ref(x1, 5))))
    # +/-1 allowed: truncation at integer boundaries under bf16 band matmuls /
    # approx reciprocal vs the f32 reference accumulation order.
    assert d1 <= 1.0, f"mismatch vs reference (16x16): {d1}"

    # Rectangular case exercising the banded row-slab + multi-row-tile path.
    x2 = jax.random.uniform(k2, (1, 1, 48, 32), dtype=jnp.float32)
    y2 = grad_edge(x2, kensize=5)
    jax.block_until_ready(y2)
    assert y2.shape == (1, 1, 48, 32)
    d2 = float(jnp.max(jnp.abs(y2 - _grad_edge_ref(x2, 5))))
    assert d2 <= 1.0, f"mismatch vs reference (48x32): {d2}"

    print("KERNEL_OK")
</pallas_src>

<mosaic_0001>
module attributes {stable_mosaic.version = 11 : i64} {
  func.func @_grad_edge_kernel(%arg0: i32, %arg1: i32, %arg2: memref<1x16x16xf32, #tpu.memory_space<vmem>>, %arg3: memref<1x16x16xbf16, #tpu.memory_space<vmem>>, %arg4: memref<16x32xbf16, #tpu.memory_space<vmem>>, %arg5: memref<16x16xbf16, #tpu.memory_space<vmem>>, %arg6: memref<1x8x16xf32, #tpu.memory_space<vmem>>) attributes {dimension_semantics = [#tpu.dimension_semantics<parallel>, #tpu.dimension_semantics<arbitrary>], iteration_bounds = array<i64: 2, 2>, scalar_prefetch = 0 : i64, scratch_operands = 0 : i64, tpu.core_type = #tpu.core_type<tc>, window_params = [{transform_indices = @transform_0, window_bounds = array<i64: 1, 16, 16>}, {transform_indices = @transform_1, window_bounds = array<i64: 1, 16, 16>}, {pipeline_mode = #tpu.pipeline_mode<synchronous>, transform_indices = @transform_2, window_bounds = array<i64: 16, 32>}, {pipeline_mode = #tpu.pipeline_mode<synchronous>, transform_indices = @transform_3, window_bounds = array<i64: 16, 16>}, {transform_indices = @transform_4, window_bounds = array<i64: 1, 8, 16>}]} {
    %c0 = arith.constant 0 : index
    %c0_0 = arith.constant 0 : index
    %c0_1 = arith.constant 0 : index
    %0 = vector.load %arg2[%c0, %c0_0, %c0_1] : memref<1x16x16xf32, #tpu.memory_space<vmem>>, vector<1x16x16xf32>
    %1 = vector.shape_cast %0 : vector<1x16x16xf32> to vector<16x16xf32>
    %2 = arith.truncf %1 : vector<16x16xf32> to vector<16x16xbf16>
    %c8_i32 = arith.constant 8 : i32
    %3 = arith.muli %arg1, %c8_i32 : i32
    %4 = tpu.assume_multiple %3, 8 : i32
    %c0_2 = arith.constant 0 : index
    %5 = arith.index_cast %4 : i32 to index
    %c0_3 = arith.constant 0 : index
    %6 = vector.load %arg2[%c0_2, %5, %c0_3] : memref<1x16x16xf32, #tpu.memory_space<vmem>>, vector<1x8x16xf32>
    %7 = vector.shape_cast %6 : vector<1x8x16xf32> to vector<8x16xf32>
    %c0_4 = arith.constant 0 : index
    %c0_5 = arith.constant 0 : index
    %c0_6 = arith.constant 0 : index
    %8 = vector.load %arg3[%c0_4, %c0_5, %c0_6] : memref<1x16x16xbf16, #tpu.memory_space<vmem>>, vector<1x16x16xbf16>
    %9 = vector.shape_cast %8 : vector<1x16x16xbf16> to vector<16x16xbf16>
    %cst = arith.constant dense<0.000000e+00> : vector<16x16xf32>
    %10 = tpu.matmul %9, %2, %cst {dimension_numbers = #tpu.dot_dimension_numbers<[1], [0], [0], [1], [0, 0, 1, 1], [], []>} : vector<16x16xbf16>, vector<16x16xbf16>, vector<16x16xf32> -> vector<16x16xf32>
    %11 = vector.extract_strided_slice %10 {offsets = [0, 0], sizes = [8, 16], strides = [1, 1]} : vector<16x16xf32> to vector<8x16xf32>
    %12 = vector.extract_strided_slice %10 {offsets = [8, 0], sizes = [8, 16], strides = [1, 1]} : vector<16x16xf32> to vector<8x16xf32>
    %13 = arith.addf %11, %12 : vector<8x16xf32>
    %14 = arith.subf %13, %7 : vector<8x16xf32>
    %15 = arith.truncf %14 : vector<8x16xf32> to vector<8x16xbf16>
    %c0_7 = arith.constant 0 : index
    %c0_8 = arith.constant 0 : index
    %16 = vector.load %arg4[%c0_7, %c0_8] : memref<16x32xbf16, #tpu.memory_space<vmem>>, vector<16x32xbf16>
    %cst_9 = arith.constant dense<0.000000e+00> : vector<8x32xf32>
    %17 = tpu.matmul %15, %16, %cst_9 {dimension_numbers = #tpu.dot_dimension_numbers<[1], [0], [0], [1], [0, 0, 1, 1], [], []>} : vector<8x16xbf16>, vector<16x32xbf16>, vector<8x32xf32> -> vector<8x32xf32>
    %cst_10 = arith.constant 6.600000e-01 : f32
    %18 = vector.broadcast %cst_10 : f32 to vector<8x32xf32>
    %19 = arith.addf %17, %18 : vector<8x32xf32>
    %20 = arith.truncf %10 : vector<16x16xf32> to vector<16x16xbf16>
    %c0_11 = arith.constant 0 : index
    %c0_12 = arith.constant 0 : index
    %21 = vector.load %arg5[%c0_11, %c0_12] : memref<16x16xbf16, #tpu.memory_space<vmem>>, vector<16x16xbf16>
    %cst_13 = arith.constant dense<0.000000e+00> : vector<16x16xf32>
    %22 = tpu.matmul %20, %21, %cst_13 {dimension_numbers = #tpu.dot_dimension_numbers<[1], [0], [0], [1], [0, 0, 1, 1], [], []>} : vector<16x16xbf16>, vector<16x16xbf16>, vector<16x16xf32> -> vector<16x16xf32>
    %cst_14 = arith.constant 6.600000e-01 : f32
    %23 = vector.broadcast %cst_14 : f32 to vector<16x16xf32>
    %24 = arith.addf %22, %23 : vector<16x16xf32>
    %25 = vector.extract_strided_slice %19 {offsets = [0, 0], sizes = [8, 16], strides = [1, 1]} : vector<8x32xf32> to vector<8x16xf32>
    %26 = vector.extract_strided_slice %19 {offsets = [0, 16], sizes = [8, 16], strides = [1, 1]} : vector<8x32xf32> to vector<8x16xf32>
    %27 = vector.extract_strided_slice %24 {offsets = [0, 0], sizes = [8, 16], strides = [1, 1]} : vector<16x16xf32> to vector<8x16xf32>
    %28 = vector.extract_strided_slice %24 {offsets = [8, 0], sizes = [8, 16], strides = [1, 1]} : vector<16x16xf32> to vector<8x16xf32>
    %29 = tpu.reciprocal %26 {approx = true} : vector<8x16xf32> -> vector<8x16xf32>
    %30 = arith.mulf %25, %29 : vector<8x16xf32>
    %31 = math.log %30 : vector<8x16xf32>
    %32 = tpu.reciprocal %28 {approx = true} : vector<8x16xf32> -> vector<8x16xf32>
    %33 = arith.mulf %27, %32 : vector<8x16xf32>
    %34 = math.log %33 : vector<8x16xf32>
    %35 = arith.mulf %31, %31 : vector<8x16xf32>
    %36 = arith.mulf %34, %34 : vector<8x16xf32>
    %37 = arith.addf %35, %36 : vector<8x16xf32>
    %38 = math.sqrt %37 : vector<8x16xf32>
    %39 = arith.cmpf one, %38, %38 : vector<8x16xf32>
    %cst_15 = arith.constant 2.14748339E+9 : f32
    %40 = vector.broadcast %cst_15 : f32 to vector<8x16xf32>
    %41 = arith.minimumf %38, %40 : vector<8x16xf32>
    %cst_16 = arith.constant 0.000000e+00 : f32
    %42 = vector.broadcast %cst_16 : f32 to vector<8x16xf32>
    %43 = arith.select %39, %42, %41 : vector<8x16xi1>, vector<8x16xf32>
    %44 = arith.fptosi %43 : vector<8x16xf32> to vector<8x16xi32>
    %c255_i32 = arith.constant 255 : i32
    %45 = vector.broadcast %c255_i32 : i32 to vector<8x16xi32>
    %46 = arith.andi %44, %45 : vector<8x16xi32>
    %47 = arith.sitofp %46 : vector<8x16xi32> to vector<8x16xf32>
    %c0_17 = arith.constant 0 : index
    %c0_18 = arith.constant 0 : index
    %c0_19 = arith.constant 0 : index
    %48 = vector.load %arg6[%c0_17, %c0_18, %c0_19] : memref<1x8x16xf32, #tpu.memory_space<vmem>>, vector<1x8x16xf32>
    %49 = vector.shape_cast %48 : vector<1x8x16xf32> to vector<8x16xf32>
    %50 = vector.shape_cast %47 : vector<8x16xf32> to vector<1x8x16xf32>
    tpu.vector_store %arg6[%c0_17, %c0_18, %c0_19], %50 {strides = array<i32>} : memref<1x8x16xf32, #tpu.memory_space<vmem>>, vector<1x8x16xf32>,
    return
  }
  func.func @transform_0(%arg0: i32, %arg1: i32) -> (i32, i32, i32) {
    %c0_i32 = arith.constant 0 : i32
    %c0_i32_0 = arith.constant 0 : i32
    %c0_i32_1 = arith.constant 0 : i32
    return %arg0, %c0_i32, %c0_i32_0 : i32, i32, i32
  }
  func.func @transform_1(%arg0: i32, %arg1: i32) -> (i32, i32, i32) {
    %c0_i32 = arith.constant 0 : i32
    %c0_i32_0 = arith.constant 0 : i32
    %c0_i32_1 = arith.constant 0 : i32
    return %arg1, %c0_i32, %c0_i32_0 : i32, i32, i32
  }
  func.func @transform_2(%arg0: i32, %arg1: i32) -> (i32, i32) {
    %c0_i32 = arith.constant 0 : i32
    %c0_i32_0 = arith.constant 0 : i32
    %c0_i32_1 = arith.constant 0 : i32
    return %c0_i32, %c0_i32_0 : i32, i32
  }
  func.func @transform_3(%arg0: i32, %arg1: i32) -> (i32, i32) {
    %c0_i32 = arith.constant 0 : i32
    %c0_i32_0 = arith.constant 0 : i32
    %c0_i32_1 = arith.constant 0 : i32
    return %c0_i32, %c0_i32_0 : i32, i32
  }
  func.func @transform_4(%arg0: i32, %arg1: i32) -> (i32, i32, i32) {
    %c0_i32 = arith.constant 0 : i32
    %c0_i32_0 = arith.constant 0 : i32
    return %arg0, %arg1, %c0_i32 : i32, i32, i32
  }
}

</mosaic_0001>

<llo_original>
// kernel: tpu_custom_call.1
$region0: #{tpu_custom_call.1}
  #allocation0 [shape = 'u32[]', space=smem, size = 0x4, offset = 0x4, fixed_abs, tag = 'smem constant byte address 0x4 - core index']
  #allocation1 [shape = 'u32[72,128]{1,0:T(1,128)}', space=vmem, size = 0x9000, scoped, tag = 'internal scratch']
  %s0 = inlined_call_operand.hbm [shape: f32[2,16,16], index: 0, kind: input, shape index: {}]
  %s1 = inlined_call_operand.hbm [shape: bf16[2,16,16], index: 1, kind: input, shape index: {}]
  %s2 = inlined_call_operand.hbm [shape: bf16[16,32], index: 2, kind: input, shape index: {}]
  %s3 = inlined_call_operand.hbm [shape: bf16[16,16], index: 3, kind: input, shape index: {}]
  %s4 = inlined_call_operand.hbm [shape: f32[2,16,16], index: 4, kind: output, shape index: {}]
  %s5 = sld [smem:[#allocation0]]
  $region65: #{tpu_custom_call.1} parent=0
    _
  %s7 = ssub.s32 1, %s5
  %s8 = scalar_select 0, %s7, %s5
  $region1: #{tpu_custom_call.1} parent=0
    #allocation2 [shape = 'u8[16384]{0}', space=vmem, size = 0x4000, scoped, tag = 'input window, operand 0']
    #allocation3 [shape = 's32[2]{0}', space=sflag, size = 0x8, scoped, tag = 'scoped memory for tpu_custom_call.1']
    #allocation4 [shape = 's32[2]{0}', space=sflag, size = 0x8, scoped, tag = 'scoped memory for tpu_custom_call.1']
    #allocation5 [shape = 'u8[8192]{0}', space=vmem, size = 0x2000, scoped, tag = 'input window, operand 1']
    #allocation6 [shape = 's32[2]{0}', space=sflag, size = 0x8, scoped, tag = 'scoped memory for tpu_custom_call.1']
    #allocation7 [shape = 'u8[4096]{0}', space=vmem, size = 0x1000, scoped, tag = 'input window, operand 2, single buffered']
    #allocation8 [shape = 'u8[4096]{0}', space=vmem, size = 0x1000, scoped, tag = 'input window, operand 3, single buffered']
    #allocation9 [shape = 's32[1]{0}', space=sflag, size = 0x4, scoped, tag = 'scoped memory for tpu_custom_call.1']
    #allocation10 [shape = 'u8[8192]{0}', space=vmem, size = 0x2000, scoped, tag = 'output window, operand 0']
    %9 = vsyncpa [#allocation3], 0
    %s10 = scalar_lea.sflag [#allocation3], 1
    %11 = vsyncpa %s10, 0
    %12 = vsyncpa [#allocation6], 0
    %s13 = scalar_lea.sflag [#allocation6], 1
    %14 = vsyncpa %s13, 0
    %15 = vsyncpa [#allocation9], 0
    %16 = vsyncpa [#allocation4], 0
    %s17 = scalar_lea.sflag [#allocation4], 1
    %18 = vsyncpa %s17, 0
    loop: start=0, step=1, limit=6
    $region2: #{tpu_custom_call.1} parent=1 // loop_pre_header
      _
    $region3: #{tpu_custom_call.1} parent=1 // loop_header
      %s20 = sphi 0, %s24
      %p21 = scmp.ge.s32.totalorder %s20, 6
      %s27 = sphi 0, %s39
      %s28 = sphi 0, %s35
      %s29 = sphi 0, %s27
      %s30 = sphi 0, %s28
      %s31 = sphi 0, %s29
      %s32 = sphi 0, %s30
      %s42 = sphi 0, %s44
      %s45 = sphi 0, %s42
      %s46 = sphi 0, %s45
      %s62 = sphi 0, %s46
      %s68 = sphi 0, %s70
      %s71 = sphi 0, %s68
      %s72 = sphi 0, %s71
      %s88 = sphi 0, %s72
      %s92 = sphi 0, %s92
      %s94 = sphi 0, %s92
      %s95 = sphi 0, %s94
      %s109 = sphi 0, %s95
      %s113 = sphi 0, %s113
      %s115 = sphi 0, %s113
      %s116 = sphi 0, %s115
      %s130 = sphi 0, %s116
      %s138 = sphi 0, %s140
      %s141 = sphi 0, %s138
      %s142 = sphi 0, %s141
      %s158 = sphi 0, %s142
    $region4: #{tpu_custom_call.1} parent=1 // loop_header_branch
      %23 = sbr.rel (%p21) target = $region8
    $region5: #{tpu_custom_call.1} parent=1 // loop_body
      %s25 = ssub.s32 %s20, 1
      %s26 = ssub.s32 %s20, 2
      %s33 = sadd.s32 1, %s28
      %p34 = scmp.ge.s32.totalorder %s33, 2
      %s35 = scalar_select %p34, 0, %s33
      %s36 = sadd.s32 1, %s27
      %s37 = scalar_select %p34, %s36, %s27
      %p38 = scmp.ge.s32.totalorder %s37, 2
      %s39 = scalar_select %p38, 0, %s37
      %s40 = ssub.s32 %s27, %s39
      %p41 = scmp.eq.s32.totalorder %s40, 0
      %s43 = sadd.s32 %s42, 1
      %s44 = scalar_select %p41, %s42, %s43
      %p47 = pneg %p41
      %p48 = scmp.eq.s32.totalorder %s20, 3
      %p49 = por %p47, %p48
      %p50 = scmp.ne.s32.totalorder %s42, %s45
      %p51 = scmp.eq.s32.totalorder %s20, 0
      %p52 = por %p50, %p51
      %p53 = scmp.ne.s32.totalorder %s42, %s45
      %p54 = scmp.eq.s32.totalorder %s25, 3
      %p55 = por %p53, %p54
      %p56 = scmp.ne.s32.totalorder %s45, %s46
      %p57 = scmp.eq.s32.totalorder %s25, 0
      %p58 = por %p56, %p57
      %p59 = scmp.ne.s32.totalorder %s45, %s46
      %p60 = scmp.eq.s32.totalorder %s26, 3
      %p61 = por %p59, %p60
      %p63 = scmp.ne.s32.totalorder %s46, %s62
      %p64 = scmp.eq.s32.totalorder %s26, 0
      %p65 = por %p63, %p64
      %s66 = ssub.s32 %s28, %s35
      %p67 = scmp.eq.s32.totalorder %s66, 0
      %s69 = sadd.s32 %s68, 1
      %s70 = scalar_select %p67, %s68, %s69
      %p73 = pneg %p67
      %p74 = scmp.eq.s32.totalorder %s20, 3
      %p75 = por %p73, %p74
      %p76 = scmp.ne.s32.totalorder %s68, %s71
      %p77 = scmp.eq.s32.totalorder %s20, 0
      %p78 = por %p76, %p77
      %p79 = scmp.ne.s32.totalorder %s68, %s71
      %p80 = scmp.eq.s32.totalorder %s25, 3
      %p81 = por %p79, %p80
      %p82 = scmp.ne.s32.totalorder %s71, %s72
      %p83 = scmp.eq.s32.totalorder %s25, 0
      %p84 = por %p82, %p83
      %p85 = scmp.ne.s32.totalorder %s71, %s72
      %p86 = scmp.eq.s32.totalorder %s26, 3
      %p87 = por %p85, %p86
      %p89 = scmp.ne.s32.totalorder %s72, %s88
      %p90 = scmp.eq.s32.totalorder %s26, 0
      %p91 = por %p89, %p90
      %s93 = sadd.s32 %s92, 1
      %p96 = scmp.eq.s32.totalorder %s20, 3
      %p97 = scmp.ne.s32.totalorder %s92, %s94
      %p98 = scmp.eq.s32.totalorder %s20, 0
      %p99 = por %p97, %p98
      %p100 = scmp.ne.s32.totalorder %s92, %s94
      %p101 = scmp.eq.s32.totalorder %s25, 3
      %p102 = por %p100, %p101
      %p103 = scmp.ne.s32.totalorder %s94, %s95
      %p104 = scmp.eq.s32.totalorder %s25, 0
      %p105 = por %p103, %p104
      %p106 = scmp.ne.s32.totalorder %s94, %s95
      %p107 = scmp.eq.s32.totalorder %s26, 3
      %p108 = por %p106, %p107
      %p110 = scmp.ne.s32.totalorder %s95, %s109
      %p111 = scmp.eq.s32.totalorder %s26, 0
      %p112 = por %p110, %p111
      %s114 = sadd.s32 %s113, 1
      %p117 = scmp.eq.s32.totalorder %s20, 3
      %p118 = scmp.ne.s32.totalorder %s113, %s115
      %p119 = scmp.eq.s32.totalorder %s20, 0
      %p120 = por %p118, %p119
      %p121 = scmp.ne.s32.totalorder %s113, %s115
      %p122 = scmp.eq.s32.totalorder %s25, 3
      %p123 = por %p121, %p122
      %p124 = scmp.ne.s32.totalorder %s115, %s116
      %p125 = scmp.eq.s32.totalorder %s25, 0
      %p126 = por %p124, %p125
      %p127 = scmp.ne.s32.totalorder %s115, %s116
      %p128 = scmp.eq.s32.totalorder %s26, 3
      %p129 = por %p127, %p128
      %p131 = scmp.ne.s32.totalorder %s116, %s130
      %p132 = scmp.eq.s32.totalorder %s26, 0
      %p133 = por %p131, %p132
      %s134 = ssub.s32 %s27, %s39
      %s135 = ssub.s32 %s28, %s35
      %s136 = sor.u32 %s134, %s135
      %p137 = scmp.eq.s32.totalorder %s136, 0
      %s139 = sadd.s32 %s138, 1
      %s140 = scalar_select %p137, %s138, %s139
      %p143 = pneg %p137
      %p144 = scmp.eq.s32.totalorder %s20, 3
      %p145 = por %p143, %p144
      %p146 = scmp.ne.s32.totalorder %s138, %s141
      %p147 = scmp.eq.s32.totalorder %s20, 0
      %p148 = por %p146, %p147
      %p149 = scmp.ne.s32.totalorder %s138, %s141
      %p150 = scmp.eq.s32.totalorder %s25, 3
      %p151 = por %p149, %p150
      %p152 = scmp.ne.s32.totalorder %s141, %s142
      %p153 = scmp.eq.s32.totalorder %s25, 0
      %p154 = por %p152, %p153
      %p155 = scmp.ne.s32.totalorder %s141, %s142
      %p156 = scmp.eq.s32.totalorder %s26, 3
      %p157 = por %p155, %p156
      %p159 = scmp.ne.s32.totalorder %s142, %s158
      %p160 = scmp.eq.s32.totalorder %s26, 0
      %p161 = por %p159, %p160
      %p162 = scmp.le.s32.totalorder 1, %s20
      %p163 = scmp.lt.s32.totalorder %s20, 5
      %p164 = pnand %p162, %p163
      %p165 = pneg %p164
      // Predicated region
      $region9: #{tpu_custom_call.1} parent=5 // pred_check
        _
      $region10: #{tpu_custom_call.1} parent=5 // pred_check_branch
        %167 = sbr.rel (%p164) target = $region12
      $region11: #{tpu_custom_call.1} parent=5 // pred_region
        %s168 = ssub.s32 %s20, 1
        // Predicated region
        $region13: #{tpu_custom_call.1} parent=11 // pred_check
          %p169 = pneg %p105
        $region14: #{tpu_custom_call.1} parent=11 // pred_check_branch
          %171 = sbr.rel (%p169) target = $region16
        $region15: #{tpu_custom_call.1} parent=11 // pred_region
          %173 = vsyncadd [#allocation6], 0
          %s174 = sshll.u32 %s2, 4
          %s175 = int_to_ptr.hbm [resolvable:$true] %s174
          %s176 = sshll.u32 [#allocation7], 4
          %s177 = int_to_ptr.vmem [resolvable:$true] %s176
          %182 = dma.hbm_to_vmem [thread:$0]  %s175, 128, %s177, [#allocation6], 64, 64, 4
        $region16: #{tpu_custom_call.1} parent=11 // pred_fallthru
          _
        // Predicated region
        $region17: #{tpu_custom_call.1} parent=11 // pred_check
          %p183 = pneg %p126
        $region18: #{tpu_custom_call.1} parent=11 // pred_check_branch
          %185 = sbr.rel (%p183) target = $region20
        $region19: #{tpu_custom_call.1} parent=11 // pred_region
          %187 = vsyncadd [#allocation9], 0
          %s188 = sshll.u32 %s3, 4
          %s189 = int_to_ptr.hbm [resolvable:$true] %s188
          %s190 = sshll.u32 [#allocation8], 4
          %s191 = int_to_ptr.vmem [resolvable:$true] %s190
          %196 = dma.hbm_to_vmem [thread:$0]  %s189, 128, %s191, [#allocation9], 64, 64, 4
        $region20: #{tpu_custom_call.1} parent=11 // pred_fallthru
          _
      $region12: #{tpu_custom_call.1} parent=5 // pred_fallthru
        _
      %p197 = scmp.lt.s32.totalorder %s20, 4
      // Predicated region
      $region21: #{tpu_custom_call.1} parent=5 // pred_check
        %p198 = pneg %p197
      $region22: #{tpu_custom_call.1} parent=5 // pred_check_branch
        %200 = sbr.rel (%p198) target = $region24
      $region23: #{tpu_custom_call.1} parent=5 // pred_region
        // Predicated region
        $region25: #{tpu_custom_call.1} parent=23 // pred_check
          %p201 = pneg %p52
        $region26: #{tpu_custom_call.1} parent=23 // pred_check_branch
          %203 = sbr.rel (%p201) target = $region28
        $region27: #{tpu_custom_call.1} parent=23 // pred_region
          %s204 = sand.u32 %s42, 1
          %s205 = scalar_lea.sflag [#allocation3], %s204
          %s206 = sand.u32 %s42, 1
          %s207 = smul.addr %s206, 16
          %s208 = scalar_lea.vmem [#allocation2], %s207
          %210 = vsyncadd %s205, 0
          %s211 = smul.addr %s27, 2
          %s212 = smul.addr %s211, 8
          %s213 = scalar_lea.hbm %s0, %s212
          %s214 = sshll.u32 %s213, 4
          %s215 = int_to_ptr.hbm [resolvable:$true] %s214
          %s216 = sshll.u32 %s208, 4
          %s217 = int_to_ptr.vmem [resolvable:$true] %s216
          %222 = dma.hbm_to_vmem [thread:$0]  %s215, 256, %s217, %s205, 128, 128, 8
        $region28: #{tpu_custom_call.1} parent=23 // pred_fallthru
          _
        // Predicated region
        $region29: #{tpu_custom_call.1} parent=23 // pred_check
          %p223 = pneg %p78
        $region30: #{tpu_custom_call.1} parent=23 // pred_check_branch
          %225 = sbr.rel (%p223) target = $region32
        $region31: #{tpu_custom_call.1} parent=23 // pred_region
          %s226 = sand.u32 %s20, 1
          %s227 = scalar_lea.sflag [#allocation6], %s226
          %s228 = sand.u32 %s68, 1
          %s229 = smul.addr %s228, 8
          %s230 = scalar_lea.vmem [#allocation5], %s229
          %232 = vsyncadd %s227, 0
          %s233 = smul.addr %s28, 2
          %s234 = smul.addr %s233, 4
          %s235 = scalar_lea.hbm %s1, %s234
          %s236 = sshll.u32 %s235, 4
          %s237 = int_to_ptr.hbm [resolvable:$true] %s236
          %s238 = sshll.u32 %s230, 4
          %s239 = int_to_ptr.vmem [resolvable:$true] %s238
          %244 = dma.hbm_to_vmem [thread:$0]  %s237, 128, %s239, %s227, 64, 64, 4
        $region32: #{tpu_custom_call.1} parent=23 // pred_fallthru
          _
      $region24: #{tpu_custom_call.1} parent=5 // pred_fallthru
        _
      %p245 = scmp.le.s32.totalorder 1, %s20
      %p246 = scmp.lt.s32.totalorder %s20, 5
      %p247 = pnand %p245, %p246
      %p248 = pneg %p247
      // Predicated region
      $region33: #{tpu_custom_call.1} parent=5 // pred_check
        _
      $region34: #{tpu_custom_call.1} parent=5 // pred_check_branch
        %250 = sbr.rel (%p247) target = $region36
      $region35: #{tpu_custom_call.1} parent=5 // pred_region
        %s251 = ssub.s32 %s20, 1
        %s252 = sand.u32 %s45, 1
        %s253 = scalar_lea.sflag [#allocation3], %s252
        %s254 = sand.u32 %s45, 1
        %s255 = smul.addr %s254, 16
        %s256 = scalar_lea.vmem [#allocation2], %s255
        // Predicated region
        $region37: #{tpu_custom_call.1} parent=35 // pred_check
          %p257 = pneg %p58
        $region38: #{tpu_custom_call.1} parent=35 // pred_check_branch
          %259 = sbr.rel (%p257) target = $region40
        $region39: #{tpu_custom_call.1} parent=35 // pred_region
          %261 = dma.done %s253, 256
        $region40: #{tpu_custom_call.1} parent=35 // pred_fallthru
          _
        %s262 = sand.u32 %s25, 1
        %s263 = scalar_lea.sflag [#allocation6], %s262
        %s264 = sand.u32 %s71, 1
        %s265 = smul.addr %s264, 8
        %s266 = scalar_lea.vmem [#allocation5], %s265
        // Predicated region
        $region41: #{tpu_custom_call.1} parent=35 // pred_check
          %p267 = pneg %p84
        $region42: #{tpu_custom_call.1} parent=35 // pred_check_branch
          %269 = sbr.rel (%p267) target = $region44
        $region43: #{tpu_custom_call.1} parent=35 // pred_region
          %271 = dma.done %s263, 128
        $region44: #{tpu_custom_call.1} parent=35 // pred_fallthru
          _
        // Predicated region
        $region45: #{tpu_custom_call.1} parent=35 // pred_check
          %p272 = pneg %p105
        $region46: #{tpu_custom_call.1} parent=35 // pred_check_branch
          %274 = sbr.rel (%p272) target = $region48
        $region47: #{tpu_custom_call.1} parent=35 // pred_region
          %276 = dma.done [#allocation6], 128
        $region48: #{tpu_custom_call.1} parent=35 // pred_fallthru
          _
        // Predicated region
        $region49: #{tpu_custom_call.1} parent=35 // pred_check
          %p277 = pneg %p126
        $region50: #{tpu_custom_call.1} parent=35 // pred_check_branch
          %279 = sbr.rel (%p277) target = $region52
        $region51: #{tpu_custom_call.1} parent=35 // pred_region
          %281 = dma.done [#allocation9], 128
        $region52: #{tpu_custom_call.1} parent=35 // pred_fallthru
          _
        %s282 = sand.u32 %s45, 1
        %s283 = scalar_lea.sflag [#allocation3], %s282
        %s284 = sand.u32 %s45, 1
        %s285 = smul.addr %s284, 16
        %s286 = scalar_lea.vmem [#allocation2], %s285
        %p287 = pneg %p58
        %p288 = pneg %p55
        %s289 = sand.u32 %s25, 1
        %s290 = scalar_lea.sflag [#allocation6], %s289
        %s291 = sand.u32 %s71, 1
        %s292 = smul.addr %s291, 8
        %s293 = scalar_lea.vmem [#allocation5], %s292
        %p294 = pneg %p84
        %p295 = pneg %p81
        %p296 = pneg %p105
        %p297 = pneg %p102
        %p298 = pneg %p126
        %p299 = pneg %p123
        %p300 = pneg %p154
        %p301 = pneg %p151
        %s302 = sand.u32 %s141, 1
        %s303 = scalar_lea.sflag [#allocation4], %s302
        %s304 = sand.u32 %s141, 1
        %s305 = smul.addr %s304, 8
        %s306 = scalar_lea.vmem [#allocation10], %s305
        %v308 = vld [vmem:[%s256] sm:$0xff]
        %v309 = vld [vmem:[%s256 + $0x8] sm:$0xff]
        %v310 = vpack.c.bf16 %v309, %v308
        %s311 = smul.u32 %s30, 8
        %s312 = scalar_lea.vmem %s256, %s311 [#allocation2]
        %v313 = vld [vmem:[%s312] sm:$0xff]
        %v314 = vld [vmem:[%s266] sm:$0xf]
        %v315 = vld [vmem:[%s266 + $0x4] sm:$0xf]
        %v318 = vunpack.c.l.b16 %v314
        %v319 = vunpack.c.l.b16 %v315
        %v320 = vpack.c.b16 %v319, %v318
        %vm321 = vcmask 130048
        %v323 = vsel %vm321, %v320, 0
        %325 = vmatpush.bf16.msra.mxu0 0
        %326 = vmatpush.bf16.msra.mxu0 0
        %327 = vmatpush.bf16.msra.mxu0 0
        %328 = vmatpush.bf16.msra.mxu0 0
        %329 = vmatpush.bf16.msra.mxu0 0
        %330 = vmatpush.bf16.msra.mxu0 0
        %331 = vmatpush.bf16.msra.mxu0 0
        %332 = vmatpush.bf16.msra.mxu0 %v310
        %333 = vmatmul.bf16.gmra.mxu0 %v323
        %v334 = vpop.f32.mrf.mxu0
        %v335 = vadd.f32 0.0, %v334
        %v336 = vpop.f32.mrf.mxu0
        %v337 = vadd.f32 0.0, %v336
        %338 = vdwg.mxu0
        %v339 = vadd.f32 %v335, %v337
        %v340 = vsub.f32 %v339, %v313
        %v341 = vpack.c.bf16 %v340, %v340
        %v342 = vld [vmem:[#allocation7] sm:$0xf]
        %v343 = vld [vmem:[#allocation7 + $0x4] sm:$0xf]
        %v346 = vunpack.c.l.b16 %v342
        %v347 = vunpack.c.l.b16 %v343
        %v348 = vpack.c.b16 %v347, %v346
        %v351 = vsel %vm321, %v341, 0
        %353 = vmatpush.bf16.msra.mxu0 0
        %354 = vmatpush.bf16.msra.mxu0 0
        %355 = vmatpush.bf16.msra.mxu0 0
        %356 = vmatpush.bf16.msra.mxu0 0
        %357 = vmatpush.bf16.msra.mxu0 0
        %358 = vmatpush.bf16.msra.mxu0 0
        %359 = vmatpush.bf16.msra.mxu0 0
        %360 = vmatpush.bf16.msra.mxu0 %v348
        %361 = vmatmul.bf16.gmra.mxu0 %v351
        %v362 = vpop.f32.mrf.mxu0
        %v363 = vadd.f32 0.66, %v362
        %v364 = vpop.f32.mrf.mxu0
        %365 = vdwg.mxu0
        %v366 = vpack.c.bf16 %v337, %v335
        %v367 = vld [vmem:[#allocation8] sm:$0xf]
        %v368 = vld [vmem:[#allocation8 + $0x4] sm:$0xf]
        %v371 = vunpack.c.l.b16 %v367
        %v372 = vunpack.c.l.b16 %v368
        %v373 = vpack.c.b16 %v372, %v371
        %v376 = vsel %vm321, %v366, 0
        %378 = vmatpush.bf16.msra.mxu0 0
        %379 = vmatpush.bf16.msra.mxu0 0
        %380 = vmatpush.bf16.msra.mxu0 0
        %381 = vmatpush.bf16.msra.mxu0 0
        %382 = vmatpush.bf16.msra.mxu0 0
        %383 = vmatpush.bf16.msra.mxu0 0
        %384 = vmatpush.bf16.msra.mxu0 0
        %385 = vmatpush.bf16.msra.mxu0 %v373
        %386 = vmatmul.bf16.gmra.mxu0 %v376
        %v387 = vpop.f32.mrf.mxu0
        %v388 = vadd.f32 0.66, %v387
        %v389 = vpop.f32.mrf.mxu0
        %v390 = vadd.f32 0.66, %v389
        %391 = vdwg.mxu0
        %v392 = vrcp.pop %v363
        %394 = vrot.lane.b32.xlu0 %v392, 112
        %v395 = vpop.permute.xlu0 %394
        %v397 = vmul.f32 %v363, %v395
        %v398 = vlog2.pop %v397
        %v399 = vmul.f32 %v398, 0.6931472
        %v400 = vrcp.pop %v390
        %v401 = vmul.f32 %v388, %v400
        %v402 = vlog2.pop %v401
        %v403 = vmul.f32 %v402, 0.6931472
        %v404 = vmul.f32 %v399, %v399
        %v405 = vmul.f32 %v403, %v403
        %v406 = vadd.f32 %v404, %v405
        %v407 = vrsqrt.pop %v406
        %v408 = vmul.f32 %v407, %v406
        %v409 = vmul.f32 %v408, %v407
        %v410 = vmul.f32 0.5, %v409
        %v411 = vsub.f32 1.5, %v410
        %v412 = vmul.f32 %v407, %v411
        %v413 = vmul.f32 %v406, %v412
        %vm414 = vcmp.eq.f32.partialorder %v406, inf
        %v415 = vsel %vm414, %v406, %v413
        %vm416 = vcmp.eq.f32.partialorder %v406, 0.0
        %v417 = vand.u32 %v406, 2147483648
        %v418 = vsel %vm416, %v417, %v415
        %vm419 = vcmp.ne.f32.partialorder %v418, %v418
        %v420 = vmin.f32 %v418, 2.1474834e+09
        %v421 = vsel %vm419, 0.0, %v420
        %v422 = vcvt.f32.s32.to.zero.pseudo %v421
        %v423 = vand.u32 %v422, 255
        %v424 = vcvt.s32.f32 %v423
        %425 = vst.msk [vmem:[%s306] sm:$0xff] %vm321, %v424
        %s426 = sand.u32 %s141, 1
        %s427 = scalar_lea.sflag [#allocation4], %s426
        %s428 = sand.u32 %s141, 1
        %s429 = smul.addr %s428, 8
        %s430 = scalar_lea.vmem [#allocation10], %s429
        // Predicated region
        $region53: #{tpu_custom_call.1} parent=35 // pred_check
          %p431 = pneg %p151
        $region54: #{tpu_custom_call.1} parent=35 // pred_check_branch
          %433 = sbr.rel (%p431) target = $region56
        $region55: #{tpu_custom_call.1} parent=35 // pred_region
          %435 = vsyncadd %s427, 0
          %s436 = smul.addr %s29, 2
          %s437 = sadd.s32 %s30, %s436
          %s438 = smul.addr %s437, 8
          %s439 = scalar_lea.hbm %s4, %s438
          %s441 = sshll.u32 %s430, 4
          %s442 = int_to_ptr.vmem [resolvable:$true] %s441
          %s443 = sshll.u32 %s439, 4
          %s444 = int_to_ptr.hbm [resolvable:$true] %s443
          %446 = dma.vmem_to_hbm [thread:$0]  %s442, 128, %s444, %s427
        $region56: #{tpu_custom_call.1} parent=35 // pred_fallthru
          _
      $region36: #{tpu_custom_call.1} parent=5 // pred_fallthru
        _
      %p447 = scmp.le.s32.totalorder 2, %s20
      // Predicated region
      $region57: #{tpu_custom_call.1} parent=5 // pred_check
        %p448 = pneg %p447
      $region58: #{tpu_custom_call.1} parent=5 // pred_check_branch
        %450 = sbr.rel (%p448) target = $region60
      $region59: #{tpu_custom_call.1} parent=5 // pred_region
        %s451 = ssub.s32 %s20, 2
        // Predicated region
        $region61: #{tpu_custom_call.1} parent=59 // pred_check
          %p452 = pneg %p157
        $region62: #{tpu_custom_call.1} parent=59 // pred_check_branch
          %454 = sbr.rel (%p452) target = $region64
        $region63: #{tpu_custom_call.1} parent=59 // pred_region
          %s455 = sand.u32 %s142, 1
          %s456 = scalar_lea.sflag [#allocation4], %s455
          %s457 = sand.u32 %s142, 1
          %s458 = smul.addr %s457, 8
          %s459 = scalar_lea.vmem [#allocation10], %s458
          %461 = dma.done %s456, 128
        $region64: #{tpu_custom_call.1} parent=59 // pred_fallthru
          _
      $region60: #{tpu_custom_call.1} parent=5 // pred_fallthru
        _
    $region6: #{tpu_custom_call.1} parent=1 // loop_footer
      %s24 = sadd.s32 1, %s20
    $region7: #{tpu_custom_call.1} parent=1 // loop_footer_branch
      %19 = sbr.rel target = $region3
    $region8: #{tpu_custom_call.1} parent=1 // loop_exit
      _
    %462 = vsyncpa [#allocation3], 1
    %s463 = scalar_lea.sflag [#allocation3], 1
    %464 = vsyncpa %s463, 1
    %465 = vsyncpa [#allocation6], 1
    %s466 = scalar_lea.sflag [#allocation6], 1
    %467 = vsyncpa %s466, 1
    %468 = vsyncpa [#allocation9], 1
    %469 = vsyncpa [#allocation4], 1
    %s470 = scalar_lea.sflag [#allocation4], 1
    %471 = vsyncpa %s470, 1

</llo_original>
